<compile_context>
chip_gen: v5e
topology: v5e:2x2
jax: 0.10.0
libtpu: 0.0.40
codegen_flags: <defaults>
</compile_context>

<pallas_src>
import functools

import jax
import jax.numpy as jnp
from jax.experimental import pallas as pl
from jax.experimental.pallas import tpu as pltpu


def _round_up(x, m):
    return ((x + m - 1) // m) * m


def _conv_phase_kernel(bp_ref, w_ref, b_ref, o_ref, *, phase_taps, tr, off_pad,
                       cout_p, cin_p):
    # bp_ref: (P, 1, Cin_p, R_in)   bf16  per-sample stride-phase slab (resident)
    # w_ref : (Cout_p, T*Cin_p)     bf16  lane-dense stacked-tap weights (resident)
    # b_ref : (Cout_p, 1)           f32
    # o_ref : (1, Cout_p, TR)       bf16  lane-dense output tile
    r0 = pl.multiple_of(pl.program_id(1) * tr, tr)
    width = tr + off_pad

    # Bias folded into the accumulator init (no separate epilogue add pass).
    acc = jnp.broadcast_to(b_ref[...], (cout_p, tr))

    col = 0
    # Phase-outer: only one stride-phase window is live at a time.  Taps within the
    # phase are stacked along the contraction dim so each phase is a single
    # (Cout_p, Kp) @ (Kp, TR) MXU matmul instead of Kp/Cin_p shallow dots.
    for p_idx, offs in phase_taps:
        window = bp_ref[p_idx, 0, :, pl.ds(r0, width)]        # (Cin_p, width) bf16
        if len(offs) == 1:
            lhs = window[:, offs[0]:offs[0] + tr]             # (Cin_p, TR)
        else:
            # TODO(synk): per-tap lane offsets are not 128-aligned, so every slice
            # costs an XLU lane shift; padding the flattened Hq*Wq plane to a
            # multiple of 128 would turn D/H tap offsets into aligned row offsets.
            lhs = jnp.concatenate([window[:, o:o + tr] for o in offs], axis=0)
        kp = cin_p * len(offs)
        acc = acc + jnp.dot(w_ref[:, col:col + kp], lhs,
                            preferred_element_type=jnp.float32)
        col += kp

    o_ref[0, :, :] = acc.astype(o_ref.dtype)                  # bf16 lane-dense store


def conv_deconv3d(x, weight, bias, stride, padding):
    """Forward of ConvDeconv3d: Conv3d(x) then nearest interpolate to x.shape[-3:]."""
    N, Cin, D, H, W = x.shape
    Cout = weight.shape[0]
    kd, kh, kw = weight.shape[2:]
    sd, sh, sw = stride
    pd, ph, pw = padding
    out_dtype = x.dtype

    Dp, Hp, Wp = D + 2 * pd, H + 2 * ph, W + 2 * pw
    Do = (Dp - kd) // sd + 1
    Ho = (Hp - kh) // sh + 1
    Wo = (Wp - kw) // sw + 1
    Dq, Hq, Wq = -(-Dp // sd), -(-Hp // sh), -(-Wp // sw)     # ceil(Dp/sd) etc.

    Cin_p = _round_up(Cin, 8)
    Cout_p = _round_up(Cout, 8)
    P = sd * sh * sw
    T = kd * kh * kw
    K = T * Cin_p

    # ---- stride-phase relayout in bf16 (cheap, ~1x input bytes, no tap duplication)
    xb = x.astype(jnp.bfloat16)                               # cast BEFORE the relayout
    xp = jnp.pad(xb, ((0, 0), (0, Cin_p - Cin),
                      (pd, pd + Dq * sd - Dp),
                      (ph, ph + Hq * sh - Hp),
                      (pw, pw + Wq * sw - Wp)))
    xr = xp.reshape(N, Cin_p, Dq, sd, Hq, sh, Wq, sw)
    xr = xr.transpose(3, 5, 7, 0, 1, 2, 4, 6)          # (sd, sh, sw, N, Cin_p, Dq, Hq, Wq)
    R = Dq * Hq * Wq
    bp = xr.reshape(P, N, Cin_p, R)

    # ---- row tiling ---------------------------------------------------------
    TR = min(1024, _round_up(R, 128))
    # Keep the grid at >= 2 total steps so v7x's two TensorCores both get work.
    while TR > 128 and N * (_round_up(R, TR) // TR) < 2:
        TR = _round_up((TR + 1) // 2, 128)
    R_out_pad = _round_up(R, TR)
    off_max = ((kd - 1) // sd) * Hq * Wq + ((kh - 1) // sh) * Wq + (kw - 1) // sw
    OFF_PAD = _round_up(max(off_max, 1), 128)
    R_in = R_out_pad + OFF_PAD
    # Slab padding is zeros; "ghost" output rows (dq>=Do / hq>=Ho / wq>=Wo) read taps
    # that wrap into neighbouring rows — benign only because they are sliced away
    # below, so keep the final [:Do,:Ho,:Wo] slice.
    bp = jnp.pad(bp, ((0, 0), (0, 0), (0, 0), (0, R_in - R)))

    # ---- static tap table grouped by stride phase + matching weight layout ---
    groups = {}
    for i in range(kd):
        for j in range(kh):
            for k in range(kw):
                p_idx = (i % sd) * (sh * sw) + (j % sh) * sw + (k % sw)
                off = (i // sd) * (Hq * Wq) + (j // sh) * Wq + (k // sw)
                groups.setdefault(p_idx, []).append(((i, j, k), off))
    phase_taps = tuple((p, tuple(off for _, off in taps)) for p, taps in groups.items())

    # lane-dense stacked weights (Cout_p, T*Cin_p); column order = phase-major,
    # tap-within-phase, channel-inner — must match the kernel's stacked LHS rows.
    wpad = jnp.pad(weight, ((0, Cout_p - Cout), (0, Cin_p - Cin),
                            (0, 0), (0, 0), (0, 0)))
    wcols = [wpad[:, :, i, j, k] for _, taps in groups.items() for (i, j, k), _ in taps]
    w_flat = jnp.concatenate(wcols, axis=1).astype(jnp.bfloat16)      # (Cout_p, K)
    b2 = jnp.pad(bias, (0, Cout_p - Cout)).reshape(Cout_p, 1).astype(jnp.float32)

    kernel = functools.partial(_conv_phase_kernel, phase_taps=phase_taps, tr=TR,
                               off_pad=OFF_PAD, cout_p=Cout_p, cin_p=Cin_p)

    # ---- VMEM budget --------------------------------------------------------
    max_kp = max(len(offs) for _, offs in phase_taps) * Cin_p
    est = (2 * (P * Cin_p * R_in * 2          # slab block (double-buffered)
                + Cout_p * K * 2              # weight block
                + Cout_p * 4                  # bias block
                + Cout_p * TR * 2)            # output block
           + Cin_p * (TR + OFF_PAD) * 2       # live phase window
           + 2 * max_kp * TR * 2              # stacked LHS temps
           + Cout_p * TR * 4)                 # f32 accumulator
    vmem_limit = int(min(48 * 2**20, max(32 * 2**20, 2 * est)))
    # TODO(synk): when `est` exceeds the 48 MiB cap (huge D*H*W / stride-3 P=27 slabs),
    # switch to a manually double-buffered (pl.ANY + make_async_copy) row-windowed
    # variant and single-buffer the resident slab/weights (pl.Buffered(1)).

    y = pl.pallas_call(
        kernel,
        out_shape=jax.ShapeDtypeStruct((N, Cout_p, R_out_pad), jnp.bfloat16),
        grid=(N, R_out_pad // TR),
        in_specs=[
            pl.BlockSpec((P, 1, Cin_p, R_in), lambda n, r: (0, n, 0, 0)),
            pl.BlockSpec((Cout_p, K), lambda n, r: (0, 0)),
            pl.BlockSpec((Cout_p, 1), lambda n, r: (0, 0)),
        ],
        out_specs=pl.BlockSpec((1, Cout_p, TR), lambda n, r: (n, 0, r)),
        compiler_params=pltpu.CompilerParams(
            dimension_semantics=("parallel", "parallel"),
            vmem_limit_bytes=vmem_limit),
    )(bp, w_flat, b2)

    # valid conv output, already (N, Cout, Do, Ho, Wo) — no transpose needed
    y = y[:, :Cout, :R].reshape(N, Cout, Dq, Hq, Wq)[:, :, :Do, :Ho, :Wo]
    y = y.astype(out_dtype)                   # upcast the SMALL tensor before upsample

    # nearest-neighbour upsample back to input spatial size (PyTorch floor rule):
    # single broadcast in the integer-factor case, single fused gather otherwise.
    if Do > 0 and Ho > 0 and Wo > 0 and D % Do == 0 and H % Ho == 0 and W % Wo == 0:
        fd, fh, fw = D // Do, H // Ho, W // Wo
        y = jnp.broadcast_to(y[:, :, :, None, :, None, :, None],
                             (N, Cout, Do, fd, Ho, fh, Wo, fw))
        y = y.reshape(N, Cout, D, H, W)
    else:
        d_idx = (jnp.arange(D) * Do) // D
        h_idx = (jnp.arange(H) * Ho) // H
        w_idx = (jnp.arange(W) * Wo) // W
        y = y[:, :, d_idx[:, None, None], h_idx[None, :, None], w_idx[None, None, :]]
    return y


def _reference(x, weight, bias, stride, padding):
    y = jax.lax.conv_general_dilated(
        x, weight,
        window_strides=stride,
        padding=[(p, p) for p in padding],
        dimension_numbers=("NCDHW", "OIDHW", "NCDHW"),
        precision=jax.lax.Precision.HIGHEST)
    y = y + bias.reshape(1, -1, 1, 1, 1)
    D, H, W = x.shape[-3:]
    Do, Ho, Wo = y.shape[-3:]
    d_idx = (jnp.arange(D) * Do) // D
    h_idx = (jnp.arange(H) * Ho) // H
    w_idx = (jnp.arange(W) * Wo) // W
    y = jnp.take(y, d_idx, axis=2)
    y = jnp.take(y, h_idx, axis=3)
    y = jnp.take(y, w_idx, axis=4)
    return y


if __name__ == "__main__":
    key = jax.random.PRNGKey(0)
    kx, kw_, kb = jax.random.split(key, 3)

    # Small shapes consistent with the module: Conv3d(Cin=4, Cout=8, k=3, stride=2, pad=1)
    N, Cin, Cout = 2, 4, 8
    D, H, W = 4, 8, 8
    ksize = (3, 3, 3)
    stride = (2, 2, 2)
    padding = (1, 1, 1)

    x = jax.random.normal(kx, (N, Cin, D, H, W), jnp.float32)

    fan_in = Cin * ksize[0] * ksize[1] * ksize[2]
    bound = 1.0 / (fan_in ** 0.5)
    weight = jax.random.uniform(kw_, (Cout, Cin) + ksize, jnp.float32, -bound, bound)
    bias = jax.random.uniform(kb, (Cout,), jnp.float32, -bound, bound)

    out = conv_deconv3d(x, weight, bias, stride, padding)
    out = jax.block_until_ready(out)

    ref = _reference(x, weight, bias, stride, padding)
    assert out.shape == (N, Cout, D, H, W), out.shape
    # bf16 matmul operands + bf16 conv output (f32 accumulation) vs f32-HIGHEST ref.
    assert jnp.allclose(out, ref, atol=5e-2, rtol=5e-2), "mismatch vs reference conv"

    print("KERNEL_OK")
</pallas_src>

<mosaic_0001>
module attributes {stable_mosaic.version = 11 : i64} {
  func.func @_conv_phase_kernel(%arg0: i32, %arg1: i32, %arg2: memref<8x1x8x256xbf16, #tpu.memory_space<vmem>>, %arg3: memref<8x216xbf16, #tpu.memory_space<vmem>>, %arg4: memref<8x1xf32, #tpu.memory_space<vmem>>, %arg5: memref<1x8x128xbf16, #tpu.memory_space<vmem>>) attributes {dimension_semantics = [#tpu.dimension_semantics<parallel>, #tpu.dimension_semantics<parallel>], iteration_bounds = array<i64: 2, 1>, scalar_prefetch = 0 : i64, scratch_operands = 0 : i64, tpu.core_type = #tpu.core_type<tc>, window_params = [{transform_indices = @transform_0, window_bounds = array<i64: 8, 1, 8, 256>}, {pipeline_mode = #tpu.pipeline_mode<synchronous>, transform_indices = @transform_1, window_bounds = array<i64: 8, 216>}, {pipeline_mode = #tpu.pipeline_mode<synchronous>, transform_indices = @transform_2, window_bounds = array<i64: 8, 1>}, {transform_indices = @transform_3, window_bounds = array<i64: 1, 8, 128>}]} {
    %c128_i32 = arith.constant 128 : i32
    %0 = arith.muli %arg1, %c128_i32 : i32
    %1 = tpu.assume_multiple %0, 128 : i32
    %c0 = arith.constant 0 : index
    %c0_0 = arith.constant 0 : index
    %2 = vector.load %arg4[%c0, %c0_0] : memref<8x1xf32, #tpu.memory_space<vmem>>, vector<8x1xf32>
    %3 = vector.shape_cast %2 : vector<8x1xf32> to vector<8x1xf32>
    %4 = vector.broadcast %3 : vector<8x1xf32> to vector<8x128xf32>
    %c0_1 = arith.constant 0 : index
    %c0_2 = arith.constant 0 : index
    %c0_3 = arith.constant 0 : index
    %5 = arith.index_cast %1 : i32 to index
    %6 = vector.load %arg2[%c0_1, %c0_2, %c0_3, %5] : memref<8x1x8x256xbf16, #tpu.memory_space<vmem>>, vector<1x1x8x256xbf16>
    %7 = vector.shape_cast %6 : vector<1x1x8x256xbf16> to vector<8x256xbf16>
    %8 = vector.extract_strided_slice %7 {offsets = [0, 0], sizes = [8, 128], strides = [1, 1]} : vector<8x256xbf16> to vector<8x128xbf16>
    %9 = vector.extract_strided_slice %7 {offsets = [0, 1], sizes = [8, 128], strides = [1, 1]} : vector<8x256xbf16> to vector<8x128xbf16>
    %10 = vector.extract_strided_slice %7 {offsets = [0, 5], sizes = [8, 128], strides = [1, 1]} : vector<8x256xbf16> to vector<8x128xbf16>
    %11 = vector.extract_strided_slice %7 {offsets = [0, 6], sizes = [8, 128], strides = [1, 1]} : vector<8x256xbf16> to vector<8x128xbf16>
    %12 = vector.extract_strided_slice %7 {offsets = [0, 25], sizes = [8, 128], strides = [1, 1]} : vector<8x256xbf16> to vector<8x128xbf16>
    %13 = vector.extract_strided_slice %7 {offsets = [0, 26], sizes = [8, 128], strides = [1, 1]} : vector<8x256xbf16> to vector<8x128xbf16>
    %14 = vector.extract_strided_slice %7 {offsets = [0, 30], sizes = [8, 128], strides = [1, 1]} : vector<8x256xbf16> to vector<8x128xbf16>
    %15 = vector.extract_strided_slice %7 {offsets = [0, 31], sizes = [8, 128], strides = [1, 1]} : vector<8x256xbf16> to vector<8x128xbf16>
    %16 = tpu.concatenate %8, %9, %10, %11, %12, %13, %14, %15 in 0 : vector<8x128xbf16>, vector<8x128xbf16>, vector<8x128xbf16>, vector<8x128xbf16>, vector<8x128xbf16>, vector<8x128xbf16>, vector<8x128xbf16>, vector<8x128xbf16> -> vector<64x128xbf16>
    %c0_4 = arith.constant 0 : index
    %c0_5 = arith.constant 0 : index
    %17 = vector.load %arg3[%c0_4, %c0_5] : memref<8x216xbf16, #tpu.memory_space<vmem>>, vector<8x64xbf16>
    %cst = arith.constant dense<0.000000e+00> : vector<8x128xf32>
    %18 = tpu.matmul %17, %16, %cst {dimension_numbers = #tpu.dot_dimension_numbers<[1], [0], [0], [1], [0, 0, 1, 1], [], []>} : vector<8x64xbf16>, vector<64x128xbf16>, vector<8x128xf32> -> vector<8x128xf32>
    %19 = arith.addf %4, %18 : vector<8x128xf32>
    %c1 = arith.constant 1 : index
    %c0_6 = arith.constant 0 : index
    %c0_7 = arith.constant 0 : index
    %20 = arith.index_cast %1 : i32 to index
    %21 = vector.load %arg2[%c1, %c0_6, %c0_7, %20] : memref<8x1x8x256xbf16, #tpu.memory_space<vmem>>, vector<1x1x8x256xbf16>
    %22 = vector.shape_cast %21 : vector<1x1x8x256xbf16> to vector<8x256xbf16>
    %23 = vector.extract_strided_slice %22 {offsets = [0, 0], sizes = [8, 128], strides = [1, 1]} : vector<8x256xbf16> to vector<8x128xbf16>
    %24 = vector.extract_strided_slice %22 {offsets = [0, 5], sizes = [8, 128], strides = [1, 1]} : vector<8x256xbf16> to vector<8x128xbf16>
    %25 = vector.extract_strided_slice %22 {offsets = [0, 25], sizes = [8, 128], strides = [1, 1]} : vector<8x256xbf16> to vector<8x128xbf16>
    %26 = vector.extract_strided_slice %22 {offsets = [0, 30], sizes = [8, 128], strides = [1, 1]} : vector<8x256xbf16> to vector<8x128xbf16>
    %27 = tpu.concatenate %23, %24, %25, %26 in 0 : vector<8x128xbf16>, vector<8x128xbf16>, vector<8x128xbf16>, vector<8x128xbf16> -> vector<32x128xbf16>
    %c0_8 = arith.constant 0 : index
    %c64 = arith.constant 64 : index
    %28 = vector.load %arg3[%c0_8, %c64] : memref<8x216xbf16, #tpu.memory_space<vmem>>, vector<8x32xbf16>
    %cst_9 = arith.constant dense<0.000000e+00> : vector<8x128xf32>
    %29 = tpu.matmul %28, %27, %cst_9 {dimension_numbers = #tpu.dot_dimension_numbers<[1], [0], [0], [1], [0, 0, 1, 1], [], []>} : vector<8x32xbf16>, vector<32x128xbf16>, vector<8x128xf32> -> vector<8x128xf32>
    %30 = arith.addf %19, %29 : vector<8x128xf32>
    %c2 = arith.constant 2 : index
    %c0_10 = arith.constant 0 : index
    %c0_11 = arith.constant 0 : index
    %31 = arith.index_cast %1 : i32 to index
    %32 = vector.load %arg2[%c2, %c0_10, %c0_11, %31] : memref<8x1x8x256xbf16, #tpu.memory_space<vmem>>, vector<1x1x8x256xbf16>
    %33 = vector.shape_cast %32 : vector<1x1x8x256xbf16> to vector<8x256xbf16>
    %34 = vector.extract_strided_slice %33 {offsets = [0, 0], sizes = [8, 128], strides = [1, 1]} : vector<8x256xbf16> to vector<8x128xbf16>
    %35 = vector.extract_strided_slice %33 {offsets = [0, 1], sizes = [8, 128], strides = [1, 1]} : vector<8x256xbf16> to vector<8x128xbf16>
    %36 = vector.extract_strided_slice %33 {offsets = [0, 25], sizes = [8, 128], strides = [1, 1]} : vector<8x256xbf16> to vector<8x128xbf16>
    %37 = vector.extract_strided_slice %33 {offsets = [0, 26], sizes = [8, 128], strides = [1, 1]} : vector<8x256xbf16> to vector<8x128xbf16>
    %38 = tpu.concatenate %34, %35, %36, %37 in 0 : vector<8x128xbf16>, vector<8x128xbf16>, vector<8x128xbf16>, vector<8x128xbf16> -> vector<32x128xbf16>
    %c0_12 = arith.constant 0 : index
    %c96 = arith.constant 96 : index
    %39 = vector.load %arg3[%c0_12, %c96] : memref<8x216xbf16, #tpu.memory_space<vmem>>, vector<8x32xbf16>
    %cst_13 = arith.constant dense<0.000000e+00> : vector<8x128xf32>
    %40 = tpu.matmul %39, %38, %cst_13 {dimension_numbers = #tpu.dot_dimension_numbers<[1], [0], [0], [1], [0, 0, 1, 1], [], []>} : vector<8x32xbf16>, vector<32x128xbf16>, vector<8x128xf32> -> vector<8x128xf32>
    %41 = arith.addf %30, %40 : vector<8x128xf32>
    %c3 = arith.constant 3 : index
    %c0_14 = arith.constant 0 : index
    %c0_15 = arith.constant 0 : index
    %42 = arith.index_cast %1 : i32 to index
    %43 = vector.load %arg2[%c3, %c0_14, %c0_15, %42] : memref<8x1x8x256xbf16, #tpu.memory_space<vmem>>, vector<1x1x8x256xbf16>
    %44 = vector.shape_cast %43 : vector<1x1x8x256xbf16> to vector<8x256xbf16>
    %45 = vector.extract_strided_slice %44 {offsets = [0, 0], sizes = [8, 128], strides = [1, 1]} : vector<8x256xbf16> to vector<8x128xbf16>
    %46 = vector.extract_strided_slice %44 {offsets = [0, 25], sizes = [8, 128], strides = [1, 1]} : vector<8x256xbf16> to vector<8x128xbf16>
    %47 = tpu.concatenate %45, %46 in 0 : vector<8x128xbf16>, vector<8x128xbf16> -> vector<16x128xbf16>
    %c0_16 = arith.constant 0 : index
    %c128 = arith.constant 128 : index
    %48 = vector.load %arg3[%c0_16, %c128] : memref<8x216xbf16, #tpu.memory_space<vmem>>, vector<8x16xbf16>
    %cst_17 = arith.constant dense<0.000000e+00> : vector<8x128xf32>
    %49 = tpu.matmul %48, %47, %cst_17 {dimension_numbers = #tpu.dot_dimension_numbers<[1], [0], [0], [1], [0, 0, 1, 1], [], []>} : vector<8x16xbf16>, vector<16x128xbf16>, vector<8x128xf32> -> vector<8x128xf32>
    %50 = arith.addf %41, %49 : vector<8x128xf32>
    %c4 = arith.constant 4 : index
    %c0_18 = arith.constant 0 : index
    %c0_19 = arith.constant 0 : index
    %51 = arith.index_cast %1 : i32 to index
    %52 = vector.load %arg2[%c4, %c0_18, %c0_19, %51] : memref<8x1x8x256xbf16, #tpu.memory_space<vmem>>, vector<1x1x8x256xbf16>
    %53 = vector.shape_cast %52 : vector<1x1x8x256xbf16> to vector<8x256xbf16>
    %54 = vector.extract_strided_slice %53 {offsets = [0, 0], sizes = [8, 128], strides = [1, 1]} : vector<8x256xbf16> to vector<8x128xbf16>
    %55 = vector.extract_strided_slice %53 {offsets = [0, 1], sizes = [8, 128], strides = [1, 1]} : vector<8x256xbf16> to vector<8x128xbf16>
    %56 = vector.extract_strided_slice %53 {offsets = [0, 5], sizes = [8, 128], strides = [1, 1]} : vector<8x256xbf16> to vector<8x128xbf16>
    %57 = vector.extract_strided_slice %53 {offsets = [0, 6], sizes = [8, 128], strides = [1, 1]} : vector<8x256xbf16> to vector<8x128xbf16>
    %58 = tpu.concatenate %54, %55, %56, %57 in 0 : vector<8x128xbf16>, vector<8x128xbf16>, vector<8x128xbf16>, vector<8x128xbf16> -> vector<32x128xbf16>
    %c0_20 = arith.constant 0 : index
    %c144 = arith.constant 144 : index
    %59 = vector.load %arg3[%c0_20, %c144] : memref<8x216xbf16, #tpu.memory_space<vmem>>, vector<8x32xbf16>
    %cst_21 = arith.constant dense<0.000000e+00> : vector<8x128xf32>
    %60 = tpu.matmul %59, %58, %cst_21 {dimension_numbers = #tpu.dot_dimension_numbers<[1], [0], [0], [1], [0, 0, 1, 1], [], []>} : vector<8x32xbf16>, vector<32x128xbf16>, vector<8x128xf32> -> vector<8x128xf32>
    %61 = arith.addf %50, %60 : vector<8x128xf32>
    %c5 = arith.constant 5 : index
    %c0_22 = arith.constant 0 : index
    %c0_23 = arith.constant 0 : index
    %62 = arith.index_cast %1 : i32 to index
    %63 = vector.load %arg2[%c5, %c0_22, %c0_23, %62] : memref<8x1x8x256xbf16, #tpu.memory_space<vmem>>, vector<1x1x8x256xbf16>
    %64 = vector.shape_cast %63 : vector<1x1x8x256xbf16> to vector<8x256xbf16>
    %65 = vector.extract_strided_slice %64 {offsets = [0, 0], sizes = [8, 128], strides = [1, 1]} : vector<8x256xbf16> to vector<8x128xbf16>
    %66 = vector.extract_strided_slice %64 {offsets = [0, 5], sizes = [8, 128], strides = [1, 1]} : vector<8x256xbf16> to vector<8x128xbf16>
    %67 = tpu.concatenate %65, %66 in 0 : vector<8x128xbf16>, vector<8x128xbf16> -> vector<16x128xbf16>
    %c0_24 = arith.constant 0 : index
    %c176 = arith.constant 176 : index
    %68 = vector.load %arg3[%c0_24, %c176] : memref<8x216xbf16, #tpu.memory_space<vmem>>, vector<8x16xbf16>
    %cst_25 = arith.constant dense<0.000000e+00> : vector<8x128xf32>
    %69 = tpu.matmul %68, %67, %cst_25 {dimension_numbers = #tpu.dot_dimension_numbers<[1], [0], [0], [1], [0, 0, 1, 1], [], []>} : vector<8x16xbf16>, vector<16x128xbf16>, vector<8x128xf32> -> vector<8x128xf32>
    %70 = arith.addf %61, %69 : vector<8x128xf32>
    %c6 = arith.constant 6 : index
    %c0_26 = arith.constant 0 : index
    %c0_27 = arith.constant 0 : index
    %71 = arith.index_cast %1 : i32 to index
    %72 = vector.load %arg2[%c6, %c0_26, %c0_27, %71] : memref<8x1x8x256xbf16, #tpu.memory_space<vmem>>, vector<1x1x8x256xbf16>
    %73 = vector.shape_cast %72 : vector<1x1x8x256xbf16> to vector<8x256xbf16>
    %74 = vector.extract_strided_slice %73 {offsets = [0, 0], sizes = [8, 128], strides = [1, 1]} : vector<8x256xbf16> to vector<8x128xbf16>
    %75 = vector.extract_strided_slice %73 {offsets = [0, 1], sizes = [8, 128], strides = [1, 1]} : vector<8x256xbf16> to vector<8x128xbf16>
    %76 = tpu.concatenate %74, %75 in 0 : vector<8x128xbf16>, vector<8x128xbf16> -> vector<16x128xbf16>
    %c0_28 = arith.constant 0 : index
    %c192 = arith.constant 192 : index
    %77 = vector.load %arg3[%c0_28, %c192] : memref<8x216xbf16, #tpu.memory_space<vmem>>, vector<8x16xbf16>
    %cst_29 = arith.constant dense<0.000000e+00> : vector<8x128xf32>
    %78 = tpu.matmul %77, %76, %cst_29 {dimension_numbers = #tpu.dot_dimension_numbers<[1], [0], [0], [1], [0, 0, 1, 1], [], []>} : vector<8x16xbf16>, vector<16x128xbf16>, vector<8x128xf32> -> vector<8x128xf32>
    %79 = arith.addf %70, %78 : vector<8x128xf32>
    %c7 = arith.constant 7 : index
    %c0_30 = arith.constant 0 : index
    %c0_31 = arith.constant 0 : index
    %80 = arith.index_cast %1 : i32 to index
    %81 = vector.load %arg2[%c7, %c0_30, %c0_31, %80] : memref<8x1x8x256xbf16, #tpu.memory_space<vmem>>, vector<1x1x8x256xbf16>
    %82 = vector.shape_cast %81 : vector<1x1x8x256xbf16> to vector<8x256xbf16>
    %83 = vector.extract_strided_slice %82 {offsets = [0, 0], sizes = [8, 128], strides = [1, 1]} : vector<8x256xbf16> to vector<8x128xbf16>
    %c0_32 = arith.constant 0 : index
    %c208 = arith.constant 208 : index
    %84 = vector.load %arg3[%c0_32, %c208] : memref<8x216xbf16, #tpu.memory_space<vmem>>, vector<8x8xbf16>
    %cst_33 = arith.constant dense<0.000000e+00> : vector<8x128xf32>
    %85 = tpu.matmul %84, %83, %cst_33 {dimension_numbers = #tpu.dot_dimension_numbers<[1], [0], [0], [1], [0, 0, 1, 1], [], []>} : vector<8x8xbf16>, vector<8x128xbf16>, vector<8x128xf32> -> vector<8x128xf32>
    %86 = arith.addf %79, %85 : vector<8x128xf32>
    %87 = arith.truncf %86 : vector<8x128xf32> to vector<8x128xbf16>
    %c0_34 = arith.constant 0 : index
    %c0_35 = arith.constant 0 : index
    %c0_36 = arith.constant 0 : index
    %88 = vector.load %arg5[%c0_34, %c0_35, %c0_36] : memref<1x8x128xbf16, #tpu.memory_space<vmem>>, vector<1x8x128xbf16>
    %89 = vector.shape_cast %88 : vector<1x8x128xbf16> to vector<8x128xbf16>
    %90 = vector.shape_cast %87 : vector<8x128xbf16> to vector<1x8x128xbf16>
    tpu.vector_store %arg5[%c0_34, %c0_35, %c0_36], %90 {strides = array<i32>} : memref<1x8x128xbf16, #tpu.memory_space<vmem>>, vector<1x8x128xbf16>,
    return
  }
  func.func @transform_0(%arg0: i32, %arg1: i32) -> (i32, i32, i32, i32) {
    %c0_i32 = arith.constant 0 : i32
    %c0_i32_0 = arith.constant 0 : i32
    %c0_i32_1 = arith.constant 0 : i32
    %c0_i32_2 = arith.constant 0 : i32
    return %c0_i32, %arg0, %c0_i32_0, %c0_i32_1 : i32, i32, i32, i32
  }
  func.func @transform_1(%arg0: i32, %arg1: i32) -> (i32, i32) {
    %c0_i32 = arith.constant 0 : i32
    %c0_i32_0 = arith.constant 0 : i32
    %c0_i32_1 = arith.constant 0 : i32
    return %c0_i32, %c0_i32_0 : i32, i32
  }
  func.func @transform_2(%arg0: i32, %arg1: i32) -> (i32, i32) {
    %c0_i32 = arith.constant 0 : i32
    %c0_i32_0 = arith.constant 0 : i32
    %c0_i32_1 = arith.constant 0 : i32
    return %c0_i32, %c0_i32_0 : i32, i32
  }
  func.func @transform_3(%arg0: i32, %arg1: i32) -> (i32, i32, i32) {
    %c0_i32 = arith.constant 0 : i32
    %c0_i32_0 = arith.constant 0 : i32
    return %arg0, %c0_i32, %arg1 : i32, i32, i32
  }
}

</mosaic_0001>

<llo_original>
// kernel: tpu_custom_call.1
$region0: #{tpu_custom_call.1}
  #allocation0 [shape = 'u32[]', space=smem, size = 0x4, offset = 0x4, fixed_abs, tag = 'smem constant byte address 0x4 - core index']
  #allocation1 [shape = 'u32[72,128]{1,0:T(1,128)}', space=vmem, size = 0x9000, scoped, tag = 'internal scratch']
  %s0 = inlined_call_operand.hbm [shape: bf16[8,2,8,256], index: 0, kind: input, shape index: {}]
  %s1 = inlined_call_operand.vmem [shape: bf16[8,216], index: 1, kind: input, shape index: {}]
  %s2 = inlined_call_operand.vmem [shape: f32[8,1], index: 2, kind: input, shape index: {}]
  %s3 = inlined_call_operand.hbm [shape: bf16[2,8,128], index: 3, kind: output, shape index: {}]
  %s4 = sld [smem:[#allocation0]]
  $region49: #{tpu_custom_call.1} parent=0
    _
  %s6 = ssub.s32 1, %s4
  %s7 = scalar_select 0, %s6, %s4
  $region1: #{tpu_custom_call.1} parent=0
    #allocation2 [shape = 'u8[65536]{0}', space=vmem, size = 0x10000, scoped, tag = 'input window, operand 0']
    #allocation3 [shape = 's32[2]{0}', space=sflag, size = 0x8, scoped, tag = 'scoped memory for tpu_custom_call.1']
    #allocation4 [shape = 's32[2]{0}', space=sflag, size = 0x8, scoped, tag = 'scoped memory for tpu_custom_call.1']
    #allocation5 [shape = 'u8[4096]{0}', space=vmem, size = 0x1000, scoped, tag = 'output window, operand 0']
    %8 = vsyncpa [#allocation3], 0
    %s9 = scalar_lea.sflag [#allocation3], 1
    %10 = vsyncpa %s9, 0
    %11 = vsyncpa [#allocation4], 0
    %s12 = scalar_lea.sflag [#allocation4], 1
    %13 = vsyncpa %s12, 0
    loop: start=0, step=1, limit=4
    $region2: #{tpu_custom_call.1} parent=1 // loop_pre_header
      _
    $region3: #{tpu_custom_call.1} parent=1 // loop_header
      %s15 = sphi 0, %s19
      %p16 = scmp.ge.s32.totalorder %s15, 4
      %s22 = sphi 0, %s34
      %s23 = sphi 0, %s30
      %s24 = sphi 0, %s22
      %s25 = sphi 0, %s23
      %s26 = sphi 0, %s24
      %s27 = sphi 0, %s25
      %s37 = sphi 0, %s39
      %s40 = sphi 0, %s37
      %s41 = sphi 0, %s40
      %s57 = sphi 0, %s41
      %s61 = sphi 0, %s61
      %s63 = sphi 0, %s61
      %s64 = sphi 0, %s63
      %s78 = sphi 0, %s64
      %s82 = sphi 0, %s82
      %s84 = sphi 0, %s82
      %s85 = sphi 0, %s84
      %s99 = sphi 0, %s85
      %s107 = sphi 0, %s109
      %s110 = sphi 0, %s107
      %s111 = sphi 0, %s110
      %s127 = sphi 0, %s111
    $region4: #{tpu_custom_call.1} parent=1 // loop_header_branch
      %18 = sbr.rel (%p16) target = $region8
    $region5: #{tpu_custom_call.1} parent=1 // loop_body
      %s20 = ssub.s32 %s15, 1
      %s21 = ssub.s32 %s15, 2
      %s28 = sadd.s32 1, %s23
      %p29 = scmp.ge.s32.totalorder %s28, 1
      %s30 = scalar_select %p29, 0, %s28
      %s31 = sadd.s32 1, %s22
      %s32 = scalar_select %p29, %s31, %s22
      %p33 = scmp.ge.s32.totalorder %s32, 2
      %s34 = scalar_select %p33, 0, %s32
      %s35 = ssub.s32 %s22, %s34
      %p36 = scmp.eq.s32.totalorder %s35, 0
      %s38 = sadd.s32 %s37, 1
      %s39 = scalar_select %p36, %s37, %s38
      %p42 = pneg %p36
      %p43 = scmp.eq.s32.totalorder %s15, 1
      %p44 = por %p42, %p43
      %p45 = scmp.ne.s32.totalorder %s37, %s40
      %p46 = scmp.eq.s32.totalorder %s15, 0
      %p47 = por %p45, %p46
      %p48 = scmp.ne.s32.totalorder %s37, %s40
      %p49 = scmp.eq.s32.totalorder %s20, 1
      %p50 = por %p48, %p49
      %p51 = scmp.ne.s32.totalorder %s40, %s41
      %p52 = scmp.eq.s32.totalorder %s20, 0
      %p53 = por %p51, %p52
      %p54 = scmp.ne.s32.totalorder %s40, %s41
      %p55 = scmp.eq.s32.totalorder %s21, 1
      %p56 = por %p54, %p55
      %p58 = scmp.ne.s32.totalorder %s41, %s57
      %p59 = scmp.eq.s32.totalorder %s21, 0
      %p60 = por %p58, %p59
      %s62 = sadd.s32 %s61, 1
      %p65 = scmp.eq.s32.totalorder %s15, 1
      %p66 = scmp.ne.s32.totalorder %s61, %s63
      %p67 = scmp.eq.s32.totalorder %s15, 0
      %p68 = por %p66, %p67
      %p69 = scmp.ne.s32.totalorder %s61, %s63
      %p70 = scmp.eq.s32.totalorder %s20, 1
      %p71 = por %p69, %p70
      %p72 = scmp.ne.s32.totalorder %s63, %s64
      %p73 = scmp.eq.s32.totalorder %s20, 0
      %p74 = por %p72, %p73
      %p75 = scmp.ne.s32.totalorder %s63, %s64
      %p76 = scmp.eq.s32.totalorder %s21, 1
      %p77 = por %p75, %p76
      %p79 = scmp.ne.s32.totalorder %s64, %s78
      %p80 = scmp.eq.s32.totalorder %s21, 0
      %p81 = por %p79, %p80
      %s83 = sadd.s32 %s82, 1
      %p86 = scmp.eq.s32.totalorder %s15, 1
      %p87 = scmp.ne.s32.totalorder %s82, %s84
      %p88 = scmp.eq.s32.totalorder %s15, 0
      %p89 = por %p87, %p88
      %p90 = scmp.ne.s32.totalorder %s82, %s84
      %p91 = scmp.eq.s32.totalorder %s20, 1
      %p92 = por %p90, %p91
      %p93 = scmp.ne.s32.totalorder %s84, %s85
      %p94 = scmp.eq.s32.totalorder %s20, 0
      %p95 = por %p93, %p94
      %p96 = scmp.ne.s32.totalorder %s84, %s85
      %p97 = scmp.eq.s32.totalorder %s21, 1
      %p98 = por %p96, %p97
      %p100 = scmp.ne.s32.totalorder %s85, %s99
      %p101 = scmp.eq.s32.totalorder %s21, 0
      %p102 = por %p100, %p101
      %s103 = ssub.s32 %s22, %s34
      %s104 = ssub.s32 %s23, %s30
      %s105 = sor.u32 %s103, %s104
      %p106 = scmp.eq.s32.totalorder %s105, 0
      %s108 = sadd.s32 %s107, 1
      %s109 = scalar_select %p106, %s107, %s108
      %p112 = pneg %p106
      %p113 = scmp.eq.s32.totalorder %s15, 1
      %p114 = por %p112, %p113
      %p115 = scmp.ne.s32.totalorder %s107, %s110
      %p116 = scmp.eq.s32.totalorder %s15, 0
      %p117 = por %p115, %p116
      %p118 = scmp.ne.s32.totalorder %s107, %s110
      %p119 = scmp.eq.s32.totalorder %s20, 1
      %p120 = por %p118, %p119
      %p121 = scmp.ne.s32.totalorder %s110, %s111
      %p122 = scmp.eq.s32.totalorder %s20, 0
      %p123 = por %p121, %p122
      %p124 = scmp.ne.s32.totalorder %s110, %s111
      %p125 = scmp.eq.s32.totalorder %s21, 1
      %p126 = por %p124, %p125
      %p128 = scmp.ne.s32.totalorder %s111, %s127
      %p129 = scmp.eq.s32.totalorder %s21, 0
      %p130 = por %p128, %p129
      %p131 = scmp.le.s32.totalorder 1, %s15
      %p132 = scmp.lt.s32.totalorder %s15, 3
      %p133 = pnand %p131, %p132
      %p134 = pneg %p133
      // Predicated region
      $region9: #{tpu_custom_call.1} parent=5 // pred_check
        _
      $region10: #{tpu_custom_call.1} parent=5 // pred_check_branch
        %136 = sbr.rel (%p133) target = $region12
      $region11: #{tpu_custom_call.1} parent=5 // pred_region
        %s137 = ssub.s32 %s15, 1
        // Predicated region
        $region13: #{tpu_custom_call.1} parent=11 // pred_check
          %p138 = pneg %p74
        $region14: #{tpu_custom_call.1} parent=11 // pred_check_branch
          %140 = sbr.rel (%p138) target = $region16
        $region15: #{tpu_custom_call.1} parent=11 // pred_region
          _
        $region16: #{tpu_custom_call.1} parent=11 // pred_fallthru
          _
        // Predicated region
        $region17: #{tpu_custom_call.1} parent=11 // pred_check
          %p141 = pneg %p95
        $region18: #{tpu_custom_call.1} parent=11 // pred_check_branch
          %143 = sbr.rel (%p141) target = $region20
        $region19: #{tpu_custom_call.1} parent=11 // pred_region
          _
        $region20: #{tpu_custom_call.1} parent=11 // pred_fallthru
          _
      $region12: #{tpu_custom_call.1} parent=5 // pred_fallthru
        _
      %p144 = scmp.lt.s32.totalorder %s15, 2
      // Predicated region
      $region21: #{tpu_custom_call.1} parent=5 // pred_check
        %p145 = pneg %p144
      $region22: #{tpu_custom_call.1} parent=5 // pred_check_branch
        %147 = sbr.rel (%p145) target = $region24
      $region23: #{tpu_custom_call.1} parent=5 // pred_region
        // Predicated region
        $region25: #{tpu_custom_call.1} parent=23 // pred_check
          %p148 = pneg %p47
        $region26: #{tpu_custom_call.1} parent=23 // pred_check_branch
          %150 = sbr.rel (%p148) target = $region28
        $region27: #{tpu_custom_call.1} parent=23 // pred_region
          %s151 = sand.u32 %s37, 1
          %s152 = scalar_lea.sflag [#allocation3], %s151
          %s153 = sand.u32 %s37, 1
          %s154 = smul.addr %s153, 64
          %s155 = scalar_lea.vmem [#allocation2], %s154
          %157 = vsyncadd %s152, 0
          %s158 = smul.addr %s22, 2
          %s159 = smul.addr %s158, 4
          %s160 = scalar_lea.hbm %s0, %s159
          %s161 = sshll.u32 %s160, 4
          %s162 = int_to_ptr.hbm [resolvable:$true] %s161
          %s163 = sshll.u32 %s155, 4
          %s164 = int_to_ptr.vmem [resolvable:$true] %s163
          %169 = dma.hbm_to_vmem [thread:$0]  %s162, 1024, %s164, %s152, 256, 128, 8
        $region28: #{tpu_custom_call.1} parent=23 // pred_fallthru
          _
      $region24: #{tpu_custom_call.1} parent=5 // pred_fallthru
        _
      %p170 = scmp.le.s32.totalorder 1, %s15
      %p171 = scmp.lt.s32.totalorder %s15, 3
      %p172 = pnand %p170, %p171
      %p173 = pneg %p172
      // Predicated region
      $region29: #{tpu_custom_call.1} parent=5 // pred_check
        _
      $region30: #{tpu_custom_call.1} parent=5 // pred_check_branch
        %175 = sbr.rel (%p172) target = $region32
      $region31: #{tpu_custom_call.1} parent=5 // pred_region
        %s176 = ssub.s32 %s15, 1
        %s177 = sand.u32 %s40, 1
        %s178 = scalar_lea.sflag [#allocation3], %s177
        %s179 = sand.u32 %s40, 1
        %s180 = smul.addr %s179, 64
        %s181 = scalar_lea.vmem [#allocation2], %s180
        // Predicated region
        $region33: #{tpu_custom_call.1} parent=31 // pred_check
          %p182 = pneg %p53
        $region34: #{tpu_custom_call.1} parent=31 // pred_check_branch
          %184 = sbr.rel (%p182) target = $region36
        $region35: #{tpu_custom_call.1} parent=31 // pred_region
          %186 = dma.done %s178, 1024
        $region36: #{tpu_custom_call.1} parent=31 // pred_fallthru
          _
        %s187 = sand.u32 %s40, 1
        %s188 = scalar_lea.sflag [#allocation3], %s187
        %s189 = sand.u32 %s40, 1
        %s190 = smul.addr %s189, 64
        %s191 = scalar_lea.vmem [#allocation2], %s190
        %p192 = pneg %p53
        %p193 = pneg %p50
        %p194 = pneg %p74
        %p195 = pneg %p71
        %p196 = pneg %p95
        %p197 = pneg %p92
        %p198 = pneg %p123
        %p199 = pneg %p120
        %s200 = sand.u32 %s110, 1
        %s201 = scalar_lea.sflag [#allocation4], %s200
        %s202 = sand.u32 %s110, 1
        %s203 = smul.addr %s202, 4
        %s204 = scalar_lea.vmem [#allocation5], %s203
        %s206 = smul.u32 %s25, 128
        %v207 = vld [vmem:[%s2] sm:$0xff]
        %209 = vset.pattern.permute.xlu0 0
        %210 = vperm.xlu0 %209, %v207
        %v211 = vpop.permute.xlu0 %210
        %s213 = sshra.s32 %s206, 7
        %s214 = sand.u32 %s206, 127
        %s215 = smul.addr %s213, 4
        %s216 = scalar_lea.vmem %s181, %s215 [#allocation2]
        %v217 = vld [vmem:[%s216] sm:$0xff]
        %v219 = vunpack.c.l.b16 %v217
        %v220 = vunpack.c.h.b16 %v217
        %v221 = vpack.c.b16 %v219, %v219
        %v222 = vpack.c.b16 %v220, %v220
        %223 = vrot.lane.b32.xlu0 %v221, 127
        %v224 = vpop.permute.xlu0 %223
        %225 = vrot.lane.b32.xlu0 %v222, 127
        %v226 = vpop.permute.xlu0 %225
        %vm227 = vcmask 1039360
        %v228 = vsel %vm227, %v224, %v226
        %229 = vrot.lane.b32.xlu0 %v221, 123
        %v230 = vpop.permute.xlu0 %229
        %231 = vrot.lane.b32.xlu0 %v222, 123
        %v232 = vpop.permute.xlu0 %231
        %vm233 = vcmask 1006592
        %v234 = vsel %vm233, %v230, %v232
        %235 = vrot.lane.b32.xlu0 %v221, 122
        %v236 = vpop.permute.xlu0 %235
        %237 = vrot.lane.b32.xlu0 %v222, 122
        %v238 = vpop.permute.xlu0 %237
        %vm239 = vcmask 998400
        %v240 = vsel %vm239, %v236, %v238
        %241 = vrot.lane.b32.xlu0 %v221, 103
        %v242 = vpop.permute.xlu0 %241
        %243 = vrot.lane.b32.xlu0 %v222, 103
        %v244 = vpop.permute.xlu0 %243
        %vm245 = vcmask 842752
        %v246 = vsel %vm245, %v242, %v244
        %247 = vrot.lane.b32.xlu0 %v221, 102
        %v248 = vpop.permute.xlu0 %247
        %249 = vrot.lane.b32.xlu0 %v222, 102
        %v250 = vpop.permute.xlu0 %249
        %vm251 = vcmask 834560
        %v252 = vsel %vm251, %v248, %v250
        %253 = vrot.lane.b32.xlu0 %v221, 98
        %v254 = vpop.permute.xlu0 %253
        %255 = vrot.lane.b32.xlu0 %v222, 98
        %v256 = vpop.permute.xlu0 %255
        %vm257 = vcmask 801792
        %v258 = vsel %vm257, %v254, %v256
        %259 = vrot.lane.b32.xlu0 %v221, 97
        %v260 = vpop.permute.xlu0 %259
        %261 = vrot.lane.b32.xlu0 %v222, 97
        %v262 = vpop.permute.xlu0 %261
        %vm263 = vcmask 793600
        %v264 = vsel %vm263, %v260, %v262
        %vm265 = vcmask 1043456
        %v268 = vsel %vm265, %v217, %v228
        %v272 = vsel %vm265, %v234, %v240
        %v276 = vsel %vm265, %v246, %v252
        %v280 = vsel %vm265, %v258, %v264
        %v282 = vld [vmem:[%s1] sm:$0xf]
        %vm283 = vcmask 523264
        %v285 = vsel %vm283, %v282, 0
        %287 = vmatpush.bf16.msra.mxu0 0
        %288 = vmatpush.bf16.msra.mxu0 0
        %289 = vmatpush.bf16.msra.mxu0 0
        %290 = vmatpush.bf16.msra.mxu0 0
        %291 = vmatpush.bf16.msra.mxu0 %v280
        %292 = vmatpush.bf16.msra.mxu0 %v276
        %293 = vmatpush.bf16.msra.mxu0 %v272
        %294 = vmatpush.bf16.msra.mxu0 %v268
        %295 = vmatmul.bf16.gmra.mxu0 %v285
        %v296 = vpop.f32.mrf.mxu0
        %v297 = vadd.f32 0.0, %v296
        %v298 = vpop.f32.mrf.mxu0
        %299 = vdwg.mxu0
        %v300 = vadd.f32 %v211, %v297
        %s301 = sadd.s32 %s213, 2
        %s302 = smul.addr %s301, 4
        %s303 = scalar_lea.vmem %s181, %s302 [#allocation2]
        %v304 = vld [vmem:[%s303] sm:$0xff]
        %v306 = vunpack.c.l.b16 %v304
        %v307 = vunpack.c.h.b16 %v304
        %v308 = vpack.c.b16 %v306, %v306
        %v309 = vpack.c.b16 %v307, %v307
        %310 = vrot.lane.b32.xlu0 %v308, 123
        %v311 = vpop.permute.xlu0 %310
        %312 = vrot.lane.b32.xlu0 %v309, 123
        %v313 = vpop.permute.xlu0 %312
        %v314 = vsel %vm233, %v311, %v313
        %315 = vrot.lane.b32.xlu0 %v308, 103
        %v316 = vpop.permute.xlu0 %315
        %317 = vrot.lane.b32.xlu0 %v309, 103
        %v318 = vpop.permute.xlu0 %317
        %v319 = vsel %vm245, %v316, %v318
        %320 = vrot.lane.b32.xlu0 %v308, 98
        %v321 = vpop.permute.xlu0 %320
        %322 = vrot.lane.b32.xlu0 %v309, 98
        %v323 = vpop.permute.xlu0 %322
        %v324 = vsel %vm257, %v321, %v323
        %v327 = vsel %vm265, %v304, %v314
        %v331 = vsel %vm265, %v319, %v324
        %v334 = vunpack.c.l.b16 %v282
        %v335 = vpack.c.b16 %v334, %v334
        %336 = vrot.lane.b32.xlu0 %v335, 64
        %v337 = vpop.permute.xlu0 %336
        %vm338 = vcmask 261120
        %v340 = vsel %vm338, %v337, 0
        %342 = vmatpush.bf16.msra.mxu0 0
        %343 = vmatpush.bf16.msra.mxu0 0
        %344 = vmatpush.bf16.msra.mxu0 0
        %345 = vmatpush.bf16.msra.mxu0 0
        %346 = vmatpush.bf16.msra.mxu0 0
        %347 = vmatpush.bf16.msra.mxu0 0
        %348 = vmatpush.bf16.msra.mxu0 %v331
        %349 = vmatpush.bf16.msra.mxu0 %v327
        %350 = vmatmul.bf16.gmra.mxu0 %v340
        %v351 = vpop.f32.mrf.mxu0
        %v352 = vadd.f32 0.0, %v351
        %v353 = vpop.f32.mrf.mxu0
        %354 = vdwg.mxu0
        %v355 = vadd.f32 %v300, %v352
        %s356 = sadd.s32 %s213, 4
        %s357 = smul.addr %s356, 4
        %s358 = scalar_lea.vmem %s181, %s357 [#allocation2]
        %v359 = vld [vmem:[%s358] sm:$0xff]
        %v361 = vunpack.c.l.b16 %v359
        %v362 = vunpack.c.h.b16 %v359
        %v363 = vpack.c.b16 %v361, %v361
        %v364 = vpack.c.b16 %v362, %v362
        %365 = vrot.lane.b32.xlu0 %v363, 127
        %v366 = vpop.permute.xlu0 %365
        %367 = vrot.lane.b32.xlu0 %v364, 127
        %v368 = vpop.permute.xlu0 %367
        %v369 = vsel %vm227, %v366, %v368
        %370 = vrot.lane.b32.xlu0 %v363, 103
        %v371 = vpop.permute.xlu0 %370
        %372 = vrot.lane.b32.xlu0 %v364, 103
        %v373 = vpop.permute.xlu0 %372
        %v374 = vsel %vm245, %v371, %v373
        %375 = vrot.lane.b32.xlu0 %v363, 102
        %v376 = vpop.permute.xlu0 %375
        %377 = vrot.lane.b32.xlu0 %v364, 102
        %v378 = vpop.permute.xlu0 %377
        %v379 = vsel %vm251, %v376, %v378
        %v382 = vsel %vm265, %v359, %v369
        %v386 = vsel %vm265, %v374, %v379
        %388 = vrot.lane.b32.xlu0 %v335, 32
        %v389 = vpop.permute.xlu0 %388
        %v391 = vsel %vm338, %v389, 0
        %393 = vmatpush.bf16.msra.mxu0 0
        %394 = vmatpush.bf16.msra.mxu0 0
        %395 = vmatpush.bf16.msra.mxu0 0
        %396 = vmatpush.bf16.msra.mxu0 0
        %397 = vmatpush.bf16.msra.mxu0 0
        %398 = vmatpush.bf16.msra.mxu0 0
        %399 = vmatpush.bf16.msra.mxu0 %v386
        %400 = vmatpush.bf16.msra.mxu0 %v382
        %401 = vmatmul.bf16.gmra.mxu0 %v391
        %v402 = vpop.f32.mrf.mxu0
        %v403 = vadd.f32 0.0, %v402
        %v404 = vpop.f32.mrf.mxu0
        %405 = vdwg.mxu0
        %v406 = vadd.f32 %v355, %v403
        %s407 = sadd.s32 %s213, 6
        %s408 = smul.addr %s407, 4
        %s409 = scalar_lea.vmem %s181, %s408 [#allocation2]
        %v410 = vld [vmem:[%s409] sm:$0xff]
        %v412 = vunpack.c.l.b16 %v410
        %v413 = vunpack.c.h.b16 %v410
        %v414 = vpack.c.b16 %v412, %v412
        %v415 = vpack.c.b16 %v413, %v413
        %416 = vrot.lane.b32.xlu0 %v414, 103
        %v417 = vpop.permute.xlu0 %416
        %418 = vrot.lane.b32.xlu0 %v415, 103
        %v419 = vpop.permute.xlu0 %418
        %v420 = vsel %vm245, %v417, %v419
        %v423 = vsel %vm265, %v410, %v420
        %v425 = vld [vmem:[%s1 + $0x4] sm:$0xf]
        %vm426 = vcmask 130048
        %v428 = vsel %vm426, %v425, 0
        %430 = vmatpush.bf16.msra.mxu0 0
        %431 = vmatpush.bf16.msra.mxu0 0
        %432 = vmatpush.bf16.msra.mxu0 0
        %433 = vmatpush.bf16.msra.mxu0 0
        %434 = vmatpush.bf16.msra.mxu0 0
        %435 = vmatpush.bf16.msra.mxu0 0
        %436 = vmatpush.bf16.msra.mxu0 0
        %437 = vmatpush.bf16.msra.mxu0 %v423
        %438 = vmatmul.bf16.gmra.mxu0 %v428
        %v439 = vpop.f32.mrf.mxu0
        %v440 = vadd.f32 0.0, %v439
        %v441 = vpop.f32.mrf.mxu0
        %442 = vdwg.mxu0
        %v443 = vadd.f32 %v406, %v440
        %s444 = sadd.s32 %s213, 8
        %s445 = smul.addr %s444, 4
        %s446 = scalar_lea.vmem %s181, %s445 [#allocation2]
        %v447 = vld [vmem:[%s446] sm:$0xff]
        %v449 = vunpack.c.l.b16 %v447
        %v450 = vunpack.c.h.b16 %v447
        %v451 = vpack.c.b16 %v449, %v449
        %v452 = vpack.c.b16 %v450, %v450
        %453 = vrot.lane.b32.xlu0 %v451, 127
        %v454 = vpop.permute.xlu0 %453
        %455 = vrot.lane.b32.xlu0 %v452, 127
        %v456 = vpop.permute.xlu0 %455
        %v457 = vsel %vm227, %v454, %v456
        %458 = vrot.lane.b32.xlu0 %v451, 123
        %v459 = vpop.permute.xlu0 %458
        %460 = vrot.lane.b32.xlu0 %v452, 123
        %v461 = vpop.permute.xlu0 %460
        %v462 = vsel %vm233, %v459, %v461
        %463 = vrot.lane.b32.xlu0 %v451, 122
        %v464 = vpop.permute.xlu0 %463
        %465 = vrot.lane.b32.xlu0 %v452, 122
        %v466 = vpop.permute.xlu0 %465
        %v467 = vsel %vm239, %v464, %v466
        %v470 = vsel %vm265, %v447, %v457
        %v474 = vsel %vm265, %v462, %v467
        %v477 = vunpack.c.l.b16 %v425
        %v478 = vpack.c.b16 %v477, %v477
        %479 = vrot.lane.b32.xlu0 %v478, 112
        %v480 = vpop.permute.xlu0 %479
        %v482 = vsel %vm338, %v480, 0
        %484 = vmatpush.bf16.msra.mxu0 0
        %485 = vmatpush.bf16.msra.mxu0 0
        %486 = vmatpush.bf16.msra.mxu0 0
        %487 = vmatpush.bf16.msra.mxu0 0
        %488 = vmatpush.bf16.msra.mxu0 0
        %489 = vmatpush.bf16.msra.mxu0 0
        %490 = vmatpush.bf16.msra.mxu0 %v474
        %491 = vmatpush.bf16.msra.mxu0 %v470
        %492 = vmatmul.bf16.gmra.mxu0 %v482
        %v493 = vpop.f32.mrf.mxu0
        %v494 = vadd.f32 0.0, %v493
        %v495 = vpop.f32.mrf.mxu0
        %496 = vdwg.mxu0
        %v497 = vadd.f32 %v443, %v494
        %s498 = sadd.s32 %s213, 10
        %s499 = smul.addr %s498, 4
        %s500 = scalar_lea.vmem %s181, %s499 [#allocation2]
        %v501 = vld [vmem:[%s500] sm:$0xff]
        %v503 = vunpack.c.l.b16 %v501
        %v504 = vunpack.c.h.b16 %v501
        %v505 = vpack.c.b16 %v503, %v503
        %v506 = vpack.c.b16 %v504, %v504
        %507 = vrot.lane.b32.xlu0 %v505, 123
        %v508 = vpop.permute.xlu0 %507
        %509 = vrot.lane.b32.xlu0 %v506, 123
        %v510 = vpop.permute.xlu0 %509
        %v511 = vsel %vm233, %v508, %v510
        %v514 = vsel %vm265, %v501, %v511
        %516 = vrot.lane.b32.xlu0 %v478, 80
        %v517 = vpop.permute.xlu0 %516
        %v519 = vsel %vm426, %v517, 0
        %521 = vmatpush.bf16.msra.mxu0 0
        %522 = vmatpush.bf16.msra.mxu0 0
        %523 = vmatpush.bf16.msra.mxu0 0
        %524 = vmatpush.bf16.msra.mxu0 0
        %525 = vmatpush.bf16.msra.mxu0 0
        %526 = vmatpush.bf16.msra.mxu0 0
        %527 = vmatpush.bf16.msra.mxu0 0
        %528 = vmatpush.bf16.msra.mxu0 %v514
        %529 = vmatmul.bf16.gmra.mxu0 %v519
        %v530 = vpop.f32.mrf.mxu0
        %v531 = vadd.f32 0.0, %v530
        %v532 = vpop.f32.mrf.mxu0
        %533 = vdwg.mxu0
        %v534 = vadd.f32 %v497, %v531
        %s535 = sadd.s32 %s213, 12
        %s536 = smul.addr %s535, 4
        %s537 = scalar_lea.vmem %s181, %s536 [#allocation2]
        %v538 = vld [vmem:[%s537] sm:$0xff]
        %v540 = vunpack.c.l.b16 %v538
        %v541 = vunpack.c.h.b16 %v538
        %v542 = vpack.c.b16 %v540, %v540
        %v543 = vpack.c.b16 %v541, %v541
        %544 = vrot.lane.b32.xlu0 %v542, 127
        %v545 = vpop.permute.xlu0 %544
        %546 = vrot.lane.b32.xlu0 %v543, 127
        %v547 = vpop.permute.xlu0 %546
        %v548 = vsel %vm227, %v545, %v547
        %v551 = vsel %vm265, %v538, %v548
        %553 = vrot.lane.b32.xlu0 %v478, 64
        %v554 = vpop.permute.xlu0 %553
        %v556 = vsel %vm426, %v554, 0
        %558 = vmatpush.bf16.msra.mxu0 0
        %559 = vmatpush.bf16.msra.mxu0 0
        %560 = vmatpush.bf16.msra.mxu0 0
        %561 = vmatpush.bf16.msra.mxu0 0
        %562 = vmatpush.bf16.msra.mxu0 0
        %563 = vmatpush.bf16.msra.mxu0 0
        %564 = vmatpush.bf16.msra.mxu0 0
        %565 = vmatpush.bf16.msra.mxu0 %v551
        %566 = vmatmul.bf16.gmra.mxu0 %v556
        %v567 = vpop.f32.mrf.mxu0
        %v568 = vadd.f32 0.0, %v567
        %v569 = vpop.f32.mrf.mxu0
        %570 = vdwg.mxu0
        %v571 = vadd.f32 %v534, %v568
        %s572 = sadd.s32 %s213, 14
        %s573 = smul.addr %s572, 4
        %s574 = scalar_lea.vmem %s181, %s573 [#allocation2]
        %v575 = vld [vmem:[%s574] sm:$0xff]
        %576 = vrot.lane.b32.xlu0 %v478, 48
        %v577 = vpop.permute.xlu0 %576
        %vm578 = vcmask 64512
        %v580 = vsel %vm578, %v577, 0
        %v583 = vsel %vm265, %v575, 0
        %585 = vmatpush.bf16.msra.mxu0 0
        %586 = vmatpush.bf16.msra.mxu0 0
        %587 = vmatpush.bf16.msra.mxu0 0
        %588 = vmatpush.bf16.msra.mxu0 0
        %589 = vmatpush.bf16.msra.mxu0 0
        %590 = vmatpush.bf16.msra.mxu0 0
        %591 = vmatpush.bf16.msra.mxu0 0
        %592 = vmatpush.bf16.msra.mxu0 %v583
        %593 = vmatmul.bf16.gmra.mxu0 %v580
        %v594 = vpop.f32.mrf.mxu0
        %v595 = vadd.f32 0.0, %v594
        %v596 = vpop.f32.mrf.mxu0
        %597 = vdwg.mxu0
        %v598 = vadd.f32 %v571, %v595
        %v599 = vpack.c.bf16 %v598, %v598
        %600 = vst [vmem:[%s204] sm:$0xf] %v599
        %s601 = sand.u32 %s110, 1
        %s602 = scalar_lea.sflag [#allocation4], %s601
        %s603 = sand.u32 %s110, 1
        %s604 = smul.addr %s603, 4
        %s605 = scalar_lea.vmem [#allocation5], %s604
        // Predicated region
        $region37: #{tpu_custom_call.1} parent=31 // pred_check
          %p606 = pneg %p120
        $region38: #{tpu_custom_call.1} parent=31 // pred_check_branch
          %608 = sbr.rel (%p606) target = $region40
        $region39: #{tpu_custom_call.1} parent=31 // pred_region
          %610 = vsyncadd %s602, 0
          %s611 = sadd.s32 %s25, %s24
          %s612 = smul.addr %s611, 4
          %s613 = scalar_lea.hbm %s3, %s612
          %s615 = sshll.u32 %s605, 4
          %s616 = int_to_ptr.vmem [resolvable:$true] %s615
          %s617 = sshll.u32 %s613, 4
          %s618 = int_to_ptr.hbm [resolvable:$true] %s617
          %620 = dma.vmem_to_hbm [thread:$0]  %s616, 64, %s618, %s602
        $region40: #{tpu_custom_call.1} parent=31 // pred_fallthru
          _
      $region32: #{tpu_custom_call.1} parent=5 // pred_fallthru
        _
      %p621 = scmp.le.s32.totalorder 2, %s15
      // Predicated region
      $region41: #{tpu_custom_call.1} parent=5 // pred_check
        %p622 = pneg %p621
      $region42: #{tpu_custom_call.1} parent=5 // pred_check_branch
        %624 = sbr.rel (%p622) target = $region44
      $region43: #{tpu_custom_call.1} parent=5 // pred_region
        %s625 = ssub.s32 %s15, 2
        // Predicated region
        $region45: #{tpu_custom_call.1} parent=43 // pred_check
          %p626 = pneg %p126
        $region46: #{tpu_custom_call.1} parent=43 // pred_check_branch
          %628 = sbr.rel (%p626) target = $region48
        $region47: #{tpu_custom_call.1} parent=43 // pred_region
          %s629 = sand.u32 %s111, 1
          %s630 = scalar_lea.sflag [#allocation4], %s629
          %s631 = sand.u32 %s111, 1
          %s632 = smul.addr %s631, 4
          %s633 = scalar_lea.vmem [#allocation5], %s632
          %635 = dma.done %s630, 64
        $region48: #{tpu_custom_call.1} parent=43 // pred_fallthru
          _
      $region44: #{tpu_custom_call.1} parent=5 // pred_fallthru
        _
    $region6: #{tpu_custom_call.1} parent=1 // loop_footer
      %s19 = sadd.s32 1, %s15
    $region7: #{tpu_custom_call.1} parent=1 // loop_footer_branch
      %14 = sbr.rel target = $region3
    $region8: #{tpu_custom_call.1} parent=1 // loop_exit
      _
    %636 = vsyncpa [#allocation3], 1
    %s637 = scalar_lea.sflag [#allocation3], 1
    %638 = vsyncpa %s637, 1
    %639 = vsyncpa [#allocation4], 1
    %s640 = scalar_lea.sflag [#allocation4], 1
    %641 = vsyncpa %s640, 1

</llo_original>
